<compile_context>
chip_gen: v7x
topology: tpu7x:2x2x1
jax: 0.10.0
libtpu: 0.0.40
codegen_flags: <defaults>
</compile_context>

<pallas_src>
import functools

import jax
import jax.numpy as jnp
from jax.experimental import pallas as pl
from jax.experimental.pallas import tpu as pltpu

BN_EPS = 1e-5

_LANE_TILES_BIG = (1024, 512, 256, 128)          # v5e / v6e (128 MiB VMEM)
_LANE_TILES_SMALL = (512, 256, 128)              # v7x (64 MiB VMEM)
_BATCH_TILES_BIG = (1024, 512, 256, 128, 64, 32, 16, 8)
_BATCH_TILES_SMALL = (512, 256, 128, 64, 32, 16, 8)


def _vmem_limit_bytes():
    """Generation-aware scoped-VMEM cap: half of physical VMEM, <= 64 MiB.

    v5e/v6e (128 MiB) -> 64 MiB, v7x (64 MiB) -> 32 MiB.  Conservative 32 MiB
    fallback if the hardware query is unavailable.
    """
    phys = 64 * 1024 * 1024
    try:
        phys = int(getattr(pltpu.get_tpu_info(), "vmem_capacity_bytes", phys))
    except Exception:
        pass
    return int(min(phys // 2, 64 * 1024 * 1024))


def _pick_tile(n, candidates):
    """Largest candidate dividing n; else largest candidate < n (ragged last
    tile handled by cdiv grid + masking / dropped OOB writes); else n itself
    (a full-dim block is always a legal TPU block)."""
    for c in candidates:
        if n % c == 0:
            return c
    for c in candidates:
        if c < n:
            return c
    return n


def _matmul_vmem_bytes(tb, td, f, in_size, out_size):
    # Double-buffered x / W / out blocks + an f32 result tile for the epilogue.
    return (2 * tb * f * in_size + 2 * f * td * in_size
            + 2 * tb * td * out_size + 2 * tb * td * 4)


def _shrink_to_fit(tb, td, f, in_size, out_size, budget):
    """Halve tiles (keeping sublane/lane alignment) until the block estimate fits."""
    # TODO(synk): very large F would additionally need K-dim tiling; not needed here.
    while _matmul_vmem_bytes(tb, td, f, in_size, out_size) > budget:
        if tb >= 16 and tb % 16 == 0 and tb >= td:
            tb //= 2
        elif td >= 256 and td % 256 == 0:
            td //= 2
        elif tb >= 16 and tb % 16 == 0:
            tb //= 2
        else:
            break
    return tb, td


# ---------------------------------------------------------------------------
# Kernels
# ---------------------------------------------------------------------------
def _linear_kernel(x_ref, w_ref, b_ref, o_ref):
    """type='ori': y = x @ W + b (MXU in native operand dtype, f32 accumulation)."""
    y = jnp.dot(x_ref[...], w_ref[...], preferred_element_type=jnp.float32)
    y = y + b_ref[...].astype(jnp.float32)
    o_ref[...] = y.astype(o_ref.dtype)


def _linear_bn_fused_kernel(x_ref, w_ref, gamma_ref, beta_ref, o_ref, *, relu):
    """Fused Linear + BatchNorm(+ReLU) when the whole batch fits in one tile.

    The Linear bias is dropped (per-column constant, cancels exactly in
    y - mean).  Normalize + affine is a single FMA pass over the [B, td] tile.
    """
    y = jnp.dot(x_ref[...], w_ref[...], preferred_element_type=jnp.float32)
    inv_b = 1.0 / y.shape[0]
    s = jnp.sum(y, axis=0, keepdims=True)
    ss = jnp.sum(y * y, axis=0, keepdims=True)
    mean = s * inv_b
    var = ss * inv_b - mean * mean
    a = gamma_ref[...].astype(jnp.float32) * jax.lax.rsqrt(var + BN_EPS)
    c = beta_ref[...].astype(jnp.float32) - mean * a
    y = y * a + c
    if relu:
        y = jnp.maximum(y, 0.0)
    o_ref[...] = y.astype(o_ref.dtype)


def _linear_stats_kernel(x_ref, w_ref, y_ref, sum_ref, ssq_ref, *, batch, tb):
    """Pass 1 of batch-tiled BN: y = x @ W (bias dropped) plus per-column
    sum / sum-of-squares accumulated across the innermost batch grid axis."""
    i_b = pl.program_id(1)
    y = jnp.dot(x_ref[...], w_ref[...], preferred_element_type=jnp.float32)
    y_ref[...] = y

    @pl.when(i_b == 0)
    def _():
        sum_ref[...] = jnp.zeros_like(sum_ref)
        ssq_ref[...] = jnp.zeros_like(ssq_ref)

    if batch % tb != 0:
        # Keep garbage rows of the ragged last batch tile out of the statistics.
        row = jax.lax.broadcasted_iota(jnp.int32, y.shape, 0)
        y = jnp.where(row < (batch - i_b * tb), y, 0.0)

    sum_ref[...] += jnp.sum(y, axis=0, keepdims=True)
    ssq_ref[...] += jnp.sum(y * y, axis=0, keepdims=True)


def _bn_affine_kernel(y_ref, sum_ref, ssq_ref, gamma_ref, beta_ref, o_ref,
                      *, batch, relu):
    """Pass 2: one FMA pass y*a + c with a = gamma*rsqrt(var+eps), c = beta - mean*a."""
    inv_b = 1.0 / batch
    mean = sum_ref[...] * inv_b
    var = ssq_ref[...] * inv_b - mean * mean
    a = gamma_ref[...].astype(jnp.float32) * jax.lax.rsqrt(var + BN_EPS)
    c = beta_ref[...].astype(jnp.float32) - mean * a
    y = y_ref[...] * a + c
    if relu:
        y = jnp.maximum(y, 0.0)
    o_ref[...] = y.astype(o_ref.dtype)


# ---------------------------------------------------------------------------
# Wrapper
# ---------------------------------------------------------------------------
def feat_bottleneck_forward(x, w_t, b, gamma=None, beta=None, *, type_="ori",
                            mxu_dtype=None, max_fused_batch=1024):
    """Forward pass of `feat_bottleneck`.

    x: [B, F]; w_t: [F, D] (transposed Linear weight); b / gamma / beta: [1, D].
    mxu_dtype: optionally cast the matmul operands (e.g. jnp.bfloat16) to halve
      HBM traffic / double MXU throughput; accumulation stays f32.
    """
    B, F = x.shape
    D = w_t.shape[1]
    use_bn = type_ in ("bn", "bn_relu", "bn_relu_drop")
    relu = type_ in ("bn_relu", "bn_relu_drop")
    out_dtype = x.dtype

    if mxu_dtype is not None:
        x = x.astype(mxu_dtype)
        w_t = w_t.astype(mxu_dtype)

    vmem_limit = _vmem_limit_bytes()
    big_vmem = vmem_limit >= 48 * 1024 * 1024
    lane_tiles = _LANE_TILES_BIG if big_vmem else _LANE_TILES_SMALL
    batch_tiles = _BATCH_TILES_BIG if big_vmem else _BATCH_TILES_SMALL
    budget = (vmem_limit * 3) // 4

    in_size = x.dtype.itemsize
    out_size = jnp.dtype(out_dtype).itemsize

    td = _pick_tile(D, lane_tiles)
    n_d = pl.cdiv(D, td)

    # TODO(synk): training-mode Dropout(p=0.5) and BatchNorm running-stat
    # (momentum) updates / eval-mode running-stat normalization are stateful;
    # this implements the batch-statistics forward (eval dropout is identity).

    if not use_bn:
        # -------- type='ori': plain Linear + bias --------
        tb = _pick_tile(B, batch_tiles)
        tb, td = _shrink_to_fit(tb, td, F, in_size, out_size, budget)
        n_b, n_d = pl.cdiv(B, tb), pl.cdiv(D, td)

        # Grid order: keep the larger operand's block index constant along the
        # innermost axis so it is not redundantly re-streamed from HBM.
        cost_d_inner = B * F + n_b * F * D       # x resident, W re-streamed
        cost_b_inner = F * D + n_d * B * F       # W resident, x re-streamed
        if cost_b_inner < cost_d_inner:
            grid = (n_d, n_b)
            x_map = lambda j, i: (i, 0)
            w_map = lambda j, i: (0, j)
            r_map = lambda j, i: (0, j)
            o_map = lambda j, i: (i, j)
        else:
            grid = (n_b, n_d)
            x_map = lambda i, j: (i, 0)
            w_map = lambda i, j: (0, j)
            r_map = lambda i, j: (0, j)
            o_map = lambda i, j: (i, j)

        return pl.pallas_call(
            _linear_kernel,
            out_shape=jax.ShapeDtypeStruct((B, D), out_dtype),
            grid_spec=pl.GridSpec(
                grid=grid,
                in_specs=[pl.BlockSpec((tb, F), x_map),
                          pl.BlockSpec((F, td), w_map),
                          pl.BlockSpec((1, td), r_map)],
                out_specs=pl.BlockSpec((tb, td), o_map)),
            compiler_params=pltpu.CompilerParams(
                dimension_semantics=("parallel", "parallel"),
                vmem_limit_bytes=vmem_limit),
        )(x, w_t, b)

    # -------- BN path (bias dropped: it cancels exactly in y - mean) --------
    fused_need = _matmul_vmem_bytes(B, td, F, in_size, out_size)
    if B <= max_fused_batch and fused_need <= budget:
        # Whole batch resident per D-tile: single fused pass, no y round-trip.
        return pl.pallas_call(
            functools.partial(_linear_bn_fused_kernel, relu=relu),
            out_shape=jax.ShapeDtypeStruct((B, D), out_dtype),
            grid_spec=pl.GridSpec(
                grid=(n_d,),
                in_specs=[pl.BlockSpec((B, F), lambda j: (0, 0)),
                          pl.BlockSpec((F, td), lambda j: (0, j)),
                          pl.BlockSpec((1, td), lambda j: (0, j)),
                          pl.BlockSpec((1, td), lambda j: (0, j))],
                out_specs=pl.BlockSpec((B, td), lambda j: (0, j))),
            compiler_params=pltpu.CompilerParams(
                dimension_semantics=("parallel",),
                vmem_limit_bytes=vmem_limit),
        )(x, w_t, gamma, beta)

    # Batch-tiled two-pass BN: bounds VMEM on v7x (64 MiB) and keeps tiles small.
    # Pass 1: y = x @ W and per-column sum / sum-of-squares; batch axis is the
    # innermost ("arbitrary") grid axis so the [1, td] stat blocks stay resident,
    # and each W tile is streamed from HBM exactly once.
    tb = _pick_tile(B, batch_tiles)
    tb, td1 = _shrink_to_fit(tb, td, F, in_size, 4, budget)
    n_b, n_d1 = pl.cdiv(B, tb), pl.cdiv(D, td1)

    y32, col_sum, col_ssq = pl.pallas_call(
        functools.partial(_linear_stats_kernel, batch=B, tb=tb),
        out_shape=(jax.ShapeDtypeStruct((B, D), jnp.float32),
                   jax.ShapeDtypeStruct((1, D), jnp.float32),
                   jax.ShapeDtypeStruct((1, D), jnp.float32)),
        grid_spec=pl.GridSpec(
            grid=(n_d1, n_b),                       # reduction (batch) innermost
            in_specs=[pl.BlockSpec((tb, F), lambda j, i: (i, 0)),
                      pl.BlockSpec((F, td1), lambda j, i: (0, j))],
            out_specs=(pl.BlockSpec((tb, td1), lambda j, i: (i, j)),
                       pl.BlockSpec((1, td1), lambda j, i: (0, j)),
                       pl.BlockSpec((1, td1), lambda j, i: (0, j)))),
        compiler_params=pltpu.CompilerParams(
            dimension_semantics=("parallel", "arbitrary"),
            vmem_limit_bytes=vmem_limit),
    )(x, w_t)

    # Pass 2: cheap elementwise normalize + affine (+ReLU); fully parallel grid.
    tb2 = _pick_tile(B, batch_tiles)
    n_b2 = pl.cdiv(B, tb2)
    return pl.pallas_call(
        functools.partial(_bn_affine_kernel, batch=B, relu=relu),
        out_shape=jax.ShapeDtypeStruct((B, D), out_dtype),
        grid_spec=pl.GridSpec(
            grid=(n_b2, n_d),
            in_specs=[pl.BlockSpec((tb2, td), lambda i, j: (i, j)),
                      pl.BlockSpec((1, td), lambda i, j: (0, j)),
                      pl.BlockSpec((1, td), lambda i, j: (0, j)),
                      pl.BlockSpec((1, td), lambda i, j: (0, j)),
                      pl.BlockSpec((1, td), lambda i, j: (0, j))],
            out_specs=pl.BlockSpec((tb2, td), lambda i, j: (i, j))),
        compiler_params=pltpu.CompilerParams(
            dimension_semantics=("parallel", "parallel"),
            vmem_limit_bytes=vmem_limit),
    )(y32, col_sum, col_ssq, gamma, beta)


# ---------------------------------------------------------------------------
# Reference / test
# ---------------------------------------------------------------------------
def _init_params(key, feature_dim, bottleneck_dim):
    kw, kg = jax.random.split(key)
    # Linear: xavier_normal_ on weight [D, F]; zero bias.
    std = (2.0 / (feature_dim + bottleneck_dim)) ** 0.5
    w = std * jax.random.normal(kw, (bottleneck_dim, feature_dim), jnp.float32)
    b = jnp.zeros((1, bottleneck_dim), jnp.float32)
    # BatchNorm1d(affine=True) with init_weights: weight ~ N(1, 0.02), bias = 0.
    gamma = 1.0 + 0.02 * jax.random.normal(kg, (1, bottleneck_dim), jnp.float32)
    beta = jnp.zeros((1, bottleneck_dim), jnp.float32)
    return w, b, gamma, beta


def _reference(x, w, b, gamma, beta, type_):
    y = x @ w.T + b
    if type_ in ("bn", "bn_relu", "bn_relu_drop"):
        mean = jnp.mean(y, axis=0, keepdims=True)
        var = jnp.mean((y - mean) ** 2, axis=0, keepdims=True)
        y = (y - mean) / jnp.sqrt(var + BN_EPS) * gamma + beta
    if type_ in ("bn_relu", "bn_relu_drop"):
        y = jnp.maximum(y, 0.0)
    return y


if __name__ == "__main__":
    feature_dim = 32
    bottleneck_dim = 256

    key = jax.random.PRNGKey(0)
    kx, kp, kx2, kx3 = jax.random.split(key, 4)
    w, b, gamma, beta = _init_params(kp, feature_dim, bottleneck_dim)
    w_t = w.T  # [F, D]

    ok = True

    # Small batch: exercises the 'ori' linear kernel and the fused BN kernel.
    x = jax.random.normal(kx, (8, feature_dim), jnp.float32)
    for type_ in ("ori", "bn", "bn_relu", "bn_relu_drop"):
        out = jax.block_until_ready(
            feat_bottleneck_forward(x, w_t, b, gamma, beta, type_=type_))
        ref = _reference(x, w, b, gamma, beta, type_)
        ok &= bool(jnp.allclose(out, ref, atol=1e-4, rtol=1e-4))

    # Multi-tile and ragged batches: exercise the batch-tiled two-pass BN
    # pipeline (max_fused_batch=0 forces it), including the masked last tile.
    for bsz, type_ in ((40, "bn"), (20, "bn_relu")):
        kx2, sub = jax.random.split(kx2)
        xb = jax.random.normal(sub, (bsz, feature_dim), jnp.float32)
        out = jax.block_until_ready(
            feat_bottleneck_forward(xb, w_t, b, gamma, beta, type_=type_,
                                    max_fused_batch=0))
        ref = _reference(xb, w, b, gamma, beta, type_)
        ok &= bool(jnp.allclose(out, ref, atol=1e-4, rtol=1e-4))

    # bf16 MXU-operand smoke test (f32 accumulation); compile/run only.
    xs = jax.random.normal(kx3, (8, feature_dim), jnp.float32)
    jax.block_until_ready(
        feat_bottleneck_forward(xs, w_t, b, gamma, beta, type_="bn_relu",
                                mxu_dtype=jnp.bfloat16))

    if ok:
        print("KERNEL_OK")
</pallas_src>

<mosaic_0001>
module attributes {stable_mosaic.version = 11 : i64} {
  func.func @_linear_kernel(%arg0: i32, %arg1: i32, %arg2: memref<8x32xf32, #tpu.memory_space<vmem>>, %arg3: memref<32x256xf32, #tpu.memory_space<vmem>>, %arg4: memref<1x256xf32, #tpu.memory_space<vmem>>, %arg5: memref<8x256xf32, #tpu.memory_space<vmem>>) attributes {dimension_semantics = [#tpu.dimension_semantics<parallel>, #tpu.dimension_semantics<parallel>], iteration_bounds = array<i64: 1, 1>, scalar_prefetch = 0 : i64, scratch_operands = 0 : i64, tpu.core_type = #tpu.core_type<tc>, window_params = [{transform_indices = @transform_0, window_bounds = array<i64: 8, 32>}, {transform_indices = @transform_1, window_bounds = array<i64: 32, 256>}, {transform_indices = @transform_2, window_bounds = array<i64: 1, 256>}, {transform_indices = @transform_3, window_bounds = array<i64: 8, 256>}]} {
    %c0 = arith.constant 0 : index
    %c0_0 = arith.constant 0 : index
    %0 = vector.load %arg2[%c0, %c0_0] : memref<8x32xf32, #tpu.memory_space<vmem>>, vector<8x32xf32>
    %c0_1 = arith.constant 0 : index
    %c0_2 = arith.constant 0 : index
    %1 = vector.load %arg3[%c0_1, %c0_2] : memref<32x256xf32, #tpu.memory_space<vmem>>, vector<32x256xf32>
    %cst = arith.constant dense<0.000000e+00> : vector<8x256xf32>
    %2 = tpu.matmul %0, %1, %cst {dimension_numbers = #tpu.dot_dimension_numbers<[1], [0], [0], [1], [0, 0, 1, 1], [], []>} : vector<8x32xf32>, vector<32x256xf32>, vector<8x256xf32> -> vector<8x256xf32>
    %c0_3 = arith.constant 0 : index
    %c0_4 = arith.constant 0 : index
    %3 = vector.load %arg4[%c0_3, %c0_4] : memref<1x256xf32, #tpu.memory_space<vmem>>, vector<1x256xf32>
    %4 = vector.broadcast %3 : vector<1x256xf32> to vector<8x256xf32>
    %5 = arith.addf %2, %4 : vector<8x256xf32>
    %c0_5 = arith.constant 0 : index
    %c0_6 = arith.constant 0 : index
    %6 = vector.load %arg5[%c0_5, %c0_6] : memref<8x256xf32, #tpu.memory_space<vmem>>, vector<8x256xf32>
    tpu.vector_store %arg5[%c0_5, %c0_6], %5 {strides = array<i32>} : memref<8x256xf32, #tpu.memory_space<vmem>>, vector<8x256xf32>,
    return
  }
  func.func @transform_0(%arg0: i32, %arg1: i32) -> (i32, i32) {
    %c0_i32 = arith.constant 0 : i32
    %c0_i32_0 = arith.constant 0 : i32
    return %arg0, %c0_i32 : i32, i32
  }
  func.func @transform_1(%arg0: i32, %arg1: i32) -> (i32, i32) {
    %c0_i32 = arith.constant 0 : i32
    %c0_i32_0 = arith.constant 0 : i32
    return %c0_i32, %arg1 : i32, i32
  }
  func.func @transform_2(%arg0: i32, %arg1: i32) -> (i32, i32) {
    %c0_i32 = arith.constant 0 : i32
    %c0_i32_0 = arith.constant 0 : i32
    return %c0_i32, %arg1 : i32, i32
  }
  func.func @transform_3(%arg0: i32, %arg1: i32) -> (i32, i32) {
    %c0_i32 = arith.constant 0 : i32
    return %arg0, %arg1 : i32, i32
  }
}

</mosaic_0001>

<llo_original>
// kernel: tpu_custom_call.1
$region0: #{tpu_custom_call.1}
  #allocation0 [shape = 'u32[]', space=smem, size = 0x4, offset = 0x4, fixed_abs, tag = 'smem constant byte address 0x4 - core index']
  #allocation1 [shape = 'u32[144,128]{1,0:T(1,128)}', space=vmem, size = 0x12000, scoped, tag = 'internal scratch']
  %s0 = inlined_call_operand.hbm [shape: f32[8,32], index: 0, kind: input, shape index: {}]
  %s1 = inlined_call_operand.hbm [shape: f32[32,256], index: 1, kind: input, shape index: {}]
  %s2 = inlined_call_operand.vmem [shape: f32[1,256], index: 2, kind: input, shape index: {}]
  %s3 = inlined_call_operand.hbm [shape: f32[8,256], index: 3, kind: output, shape index: {}]
  %s4 = sld [smem:[#allocation0]]
  $region30: #{tpu_custom_call.1} parent=0
    _
  %s6 = ssub.s32 1, %s4
  %s7 = scalar_select 0, %s6, %s4
  $region1: #{tpu_custom_call.1} parent=0
    #allocation2 [shape = 'u8[4096]{0}', space=vmem, size = 0x1000, scoped, tag = 'input window, operand 0, single buffered']
    #allocation3 [shape = 's32[1]{0}', space=sflag, size = 0x4, scoped, tag = 'scoped memory for tpu_custom_call.1']
    #allocation4 [shape = 's32[1]{0}', space=sflag, size = 0x4, scoped, tag = 'scoped memory for tpu_custom_call.1']
    #allocation5 [shape = 'u8[32768]{0}', space=vmem, size = 0x8000, scoped, tag = 'input window, operand 1, single buffered']
    #allocation6 [shape = 's32[1]{0}', space=sflag, size = 0x4, scoped, tag = 'scoped memory for tpu_custom_call.1']
    #allocation7 [shape = 'u8[8192]{0}', space=vmem, size = 0x2000, scoped, tag = 'output window, operand 0, single buffered']
    %8 = vsyncpa [#allocation3], 0
    %9 = vsyncpa [#allocation6], 0
    %10 = vsyncpa [#allocation4], 0
    // Predicated region
    $region2: #{tpu_custom_call.1} parent=1 // pred_check
      _
    $region3: #{tpu_custom_call.1} parent=1 // pred_check_branch
      %12 = sbr.rel (0) target = $region5
    $region4: #{tpu_custom_call.1} parent=1 // pred_region
      %s14 = ssub.s32 128, 128
      %15 = vsyncadd [#allocation3], %s14
      %s17 = sshll.u32 [#allocation2], 4
      %s18 = int_to_ptr.vmem [resolvable:$true] %s17
      %20 = dma.hbm_to_vmem [thread:$0]  %s0, 128, %s18, [#allocation3]
    $region5: #{tpu_custom_call.1} parent=1 // pred_fallthru
      _
    // Predicated region
    $region6: #{tpu_custom_call.1} parent=1 // pred_check
      _
    $region7: #{tpu_custom_call.1} parent=1 // pred_check_branch
      %22 = sbr.rel (0) target = $region9
    $region8: #{tpu_custom_call.1} parent=1 // pred_region
      %s24 = ssub.s32 1024, 1024
      %25 = vsyncadd [#allocation6], %s24
      %s26 = sshll.u32 [#allocation5], 4
      %s27 = int_to_ptr.vmem [resolvable:$true] %s26
      %32 = dma.hbm_to_vmem [thread:$0]  %s1, 1024, %s27, [#allocation6], 256, 256, 16
    $region9: #{tpu_custom_call.1} parent=1 // pred_fallthru
      _
    // Predicated region
    $region10: #{tpu_custom_call.1} parent=1 // pred_check
      _
    $region11: #{tpu_custom_call.1} parent=1 // pred_check_branch
      %34 = sbr.rel (0) target = $region13
    $region12: #{tpu_custom_call.1} parent=1 // pred_region
      _
    $region13: #{tpu_custom_call.1} parent=1 // pred_fallthru
      _
    // Predicated region
    $region14: #{tpu_custom_call.1} parent=1 // pred_check
      _
    $region15: #{tpu_custom_call.1} parent=1 // pred_check_branch
      %36 = sbr.rel (0) target = $region17
    $region16: #{tpu_custom_call.1} parent=1 // pred_region
      %37 = dma.done [#allocation3], 128
    $region17: #{tpu_custom_call.1} parent=1 // pred_fallthru
      _
    // Predicated region
    $region18: #{tpu_custom_call.1} parent=1 // pred_check
      _
    $region19: #{tpu_custom_call.1} parent=1 // pred_check_branch
      %39 = sbr.rel (0) target = $region21
    $region20: #{tpu_custom_call.1} parent=1 // pred_region
      %40 = dma.done [#allocation6], 1024
    $region21: #{tpu_custom_call.1} parent=1 // pred_fallthru
      _
    %v41 = vld [vmem:[#allocation2] sm:$0xff]
    %v42 = vld [vmem:[#allocation5] sm:$0xff]
    %v43 = vld [vmem:[#allocation5 + $0x8] sm:$0xff]
    %v44 = vld [vmem:[#allocation5 + $0x10] sm:$0xff]
    %v45 = vld [vmem:[#allocation5 + $0x18] sm:$0xff]
    %v46 = vld [vmem:[#allocation5 + $0x20] sm:$0xff]
    %v47 = vld [vmem:[#allocation5 + $0x28] sm:$0xff]
    %v48 = vld [vmem:[#allocation5 + $0x30] sm:$0xff]
    %v49 = vld [vmem:[#allocation5 + $0x38] sm:$0xff]
    %v50 = vld [vmem:[%s2] sm:$0x3]
    %v52 = vlaneseq
    %v53 = vshrl.u32 %v52, 7
    %v54 = vsub.s32 0, %v53
    %v55 = vrot.slane %v50, %v54
    %v56 = vlaneseq
    %v57 = vshrl.u32 %v56, 7
    %v58 = vsub.s32 1, %v57
    %v59 = vrot.slane %v50, %v58
    %vm62 = vcmask 261120
    %v64 = vsel %vm62, %v41, 0
    %66 = vmatprep.subr.mxu0 %v43
    %67 = vmatpush1.msra.mxu0 %v42
    %68 = vmatprep.subr.mxu0 %v45
    %69 = vmatpush1.msra.mxu0 %v44
    %70 = vmatprep.subr.mxu0 %v47
    %71 = vmatpush1.msra.mxu0 %v46
    %72 = vmatprep.subr.mxu0 %v49
    %73 = vmatpush1.msra.mxu0 %v48
    %74 = vmatprep.subr.mxu0 0.0
    %75 = vmatpush1.msra.mxu0 0.0
    %76 = vmatprep.subr.mxu0 0.0
    %77 = vmatpush1.msra.mxu0 0.0
    %78 = vmatprep.subr.mxu0 0.0
    %79 = vmatpush1.msra.mxu0 0.0
    %80 = vmatprep.subr.mxu0 0.0
    %81 = vmatpush1.msra.mxu0 0.0
    %82 = vmatprep.subr.mxu0 0.0
    %83 = vmatpush1.msra.mxu0 0.0
    %84 = vmatprep.subr.mxu0 0.0
    %85 = vmatpush1.msra.mxu0 0.0
    %86 = vmatprep.subr.mxu0 0.0
    %87 = vmatpush1.msra.mxu0 0.0
    %88 = vmatprep.subr.mxu0 0.0
    %89 = vmatpush1.msra.mxu0 0.0
    %90 = vmatprep.subr.mxu0 0.0
    %91 = vmatpush1.msra.mxu0 0.0
    %92 = vmatprep.subr.mxu0 0.0
    %93 = vmatpush1.msra.mxu0 0.0
    %94 = vmatprep.subr.mxu0 0.0
    %95 = vmatpush1.msra.mxu0 0.0
    %96 = vmatprep.subr.mxu0 0.0
    %97 = vmatpush1.msra.mxu0 0.0
    %98 = vmatprep.subr.mxu0 0.0
    %99 = vmatpush1.msra.mxu0 0.0
    %100 = vmatprep.subr.mxu0 0.0
    %101 = vmatpush1.msra.mxu0 0.0
    %102 = vmatprep.subr.mxu0 0.0
    %103 = vmatpush1.msra.mxu0 0.0
    %104 = vmatprep.subr.mxu0 0.0
    %105 = vmatpush1.msra.mxu0 0.0
    %106 = vmatprep.subr.mxu0 0.0
    %107 = vmatpush1.msra.mxu0 0.0
    %108 = vmatprep.subr.mxu0 0.0
    %109 = vmatpush1.msra.mxu0 0.0
    %110 = vmatprep.subr.mxu0 0.0
    %111 = vmatpush1.msra.mxu0 0.0
    %112 = vmatprep.subr.mxu0 0.0
    %113 = vmatpush1.msra.mxu0 0.0
    %114 = vmatprep.subr.mxu0 0.0
    %115 = vmatpush1.msra.mxu0 0.0
    %116 = vmatprep.subr.mxu0 0.0
    %117 = vmatpush1.msra.mxu0 0.0
    %118 = vmatprep.subr.mxu0 0.0
    %119 = vmatpush1.msra.mxu0 0.0
    %120 = vmatprep.subr.mxu0 0.0
    %121 = vmatpush1.msra.mxu0 0.0
    %122 = vmatprep.subr.mxu0 0.0
    %123 = vmatpush1.msra.mxu0 0.0
    %124 = vmatprep.subr.mxu0 0.0
    %125 = vmatpush1.msra.mxu0 0.0
    %126 = vmatprep.subr.mxu0 0.0
    %127 = vmatpush1.msra.mxu0 0.0
    %128 = vmatprep.subr.mxu0 0.0
    %129 = vmatpush1.msra.mxu0 0.0
    %130 = vmatprep.mubr.f32.mxu0 0.0
    %131 = vmatmul.mubr.f32.gmra.mrb[0].mxu0 %v64
    %v132 = vpop.f32.mrb[0].mxu0
    %v133 = vadd.f32 %v55, %v132
    %v134 = vpop.f32.mrb[0].mxu0
    %v135 = vadd.f32 %v59, %v134
    %136 = vdwg.mxu0
    %137 = vst [vmem:[#allocation7] sm:$0xff] %v133
    %138 = vst [vmem:[#allocation7 + $0x8] sm:$0xff] %v135
    // Predicated region
    $region22: #{tpu_custom_call.1} parent=1 // pred_check
      _
    $region23: #{tpu_custom_call.1} parent=1 // pred_check_branch
      %140 = sbr.rel (0) target = $region25
    $region24: #{tpu_custom_call.1} parent=1 // pred_region
      %s142 = ssub.s32 256, 256
      %143 = vsyncadd [#allocation4], %s142
      %s145 = sshll.u32 [#allocation7], 4
      %s146 = int_to_ptr.vmem [resolvable:$true] %s145
      %148 = dma.vmem_to_hbm [thread:$0]  %s146, 256, %s3, [#allocation4]
    $region25: #{tpu_custom_call.1} parent=1 // pred_fallthru
      _
    // Predicated region
    $region26: #{tpu_custom_call.1} parent=1 // pred_check
      _
    $region27: #{tpu_custom_call.1} parent=1 // pred_check_branch
      %150 = sbr.rel (0) target = $region29
    $region28: #{tpu_custom_call.1} parent=1 // pred_region
      %151 = dma.done [#allocation4], 256
    $region29: #{tpu_custom_call.1} parent=1 // pred_fallthru
      _
    %152 = vsyncpa [#allocation3], 1
    %153 = vsyncpa [#allocation6], 1
    %154 = vsyncpa [#allocation4], 1

</llo_original>
